<compile_context>
chip_gen: v7x
topology: tpu7x:2x2x1
jax: 0.10.0
libtpu: 0.0.40
codegen_flags: <defaults>
</compile_context>

<pallas_src>
import functools
import math

import jax
import jax.numpy as jnp
from jax.experimental import pallas as pl
from jax.experimental.pallas import tpu as pltpu


_LANES = 128
_VMEM_SPEC = pl.BlockSpec(memory_space=pltpu.MemorySpace.VMEM)


def _round_up_lanes(n):
    return _LANES * pl.cdiv(n, _LANES)


# ----------------------------- Fused Pallas kernel --------------------------

def _fused_mlp_kernel(num_hidden, x_ref, *refs):
    # refs layout (all padded, per-layer padding):
    #   for i in range(num_hidden): w_i:(Pin_i, Pout_i), gamma_i:(1, Pout_i), beta_i:(1, Pout_i)
    #   then wl:(Plast, Pout), bl:(1, Pout), then o_ref:(B, Pout)
    # Padded columns of every layer stay exactly 0 by construction (gamma/beta/weights
    # are ZERO-padded, so scale==0 in padded lanes).
    o_ref = refs[-1]
    layer_refs = refs[: 3 * num_hidden]
    wl_ref = refs[3 * num_hidden]
    bl_ref = refs[3 * num_hidden + 1]

    h = x_ref[...]
    for i in range(num_hidden):                 # static unroll; L is tiny & known at trace time
        w_ref = layer_refs[3 * i]
        gamma = layer_refs[3 * i + 1][...]      # (1, Pout_i)
        beta = layer_refs[3 * i + 2][...]       # (1, Pout_i)

        # Hidden-layer Linear bias omitted: exactly cancelled by training-mode BN mean.
        y = jnp.dot(h, w_ref[...], preferred_element_type=jnp.float32)

        # BatchNorm1d (training mode, biased variance), two-pass moments, folded with
        # the affine + ReLU epilogue.  Dropout = identity (eval semantics).
        mu = jnp.mean(y, axis=0, keepdims=True)             # (1, Pout_i)
        d = y - mu
        var = jnp.mean(d * d, axis=0, keepdims=True)        # (1, Pout_i)
        scale = gamma * jax.lax.rsqrt(var + 1e-5)            # 0 in padded lanes
        h = jnp.maximum(d * scale + beta, 0.0)

    # Final Linear into a lane-dense padded (B, Pout) tile (unmasked full-lane stores).
    o_ref[...] = (
        jnp.dot(h, wl_ref[...], preferred_element_type=jnp.float32) + bl_ref[...]
    )


# --------------------------- Parameter construction --------------------------

def init_params(node_sizes, key):
    """Deterministic init mirroring nn.Linear default U(-1/sqrt(fan_in), 1/sqrt(fan_in))
    and BatchNorm1d defaults (gamma=1, beta=0). Unpadded, (in, out) weight layout."""
    params = {"hidden": [], "last": None}
    hidden_size = len(node_sizes)
    for i in range(hidden_size - 1):
        fan_in, fan_out = node_sizes[i], node_sizes[i + 1]
        k = 1.0 / math.sqrt(fan_in)
        key, kw, kb = jax.random.split(key, 3)
        w = jax.random.uniform(kw, (fan_in, fan_out), jnp.float32, -k, k)
        b = jax.random.uniform(kb, (1, fan_out), jnp.float32, -k, k)
        gamma = jnp.ones((1, fan_out), jnp.float32)
        beta = jnp.zeros((1, fan_out), jnp.float32)
        params["hidden"].append((w, b, gamma, beta))
    fan_in = node_sizes[-1]
    k = 1.0 / math.sqrt(fan_in)
    key, kw, kb = jax.random.split(key, 3)
    w_last = jax.random.uniform(kw, (fan_in, 2), jnp.float32, -k, k)
    b_last = jax.random.uniform(kb, (1, 2), jnp.float32, -k, k)
    params["last"] = (w_last, b_last)
    return params


def _pad2(a, rows, cols):
    return jnp.pad(a, ((0, rows - a.shape[0]), (0, cols - a.shape[1])))


def pack_params(params, node_sizes):
    """Zero-pad each layer to its OWN lane-dense dims (per-layer padding, not global max).
    Hidden-layer Linear biases are intentionally dropped (cancelled by training-mode BN).
    Returns a flat tuple: (w_0, gamma_0, beta_0, ..., w_last, b_last)."""
    packed = []
    for (w, _b, gamma, beta) in params["hidden"]:
        fan_in, fan_out = w.shape
        p_in, p_out = _round_up_lanes(fan_in), _round_up_lanes(fan_out)
        packed.append(_pad2(w, p_in, p_out))
        # gamma/beta are ZERO-padded (not one-padded) so padded lanes stay exactly 0.
        packed.append(_pad2(gamma, 1, p_out))
        packed.append(_pad2(beta, 1, p_out))
    w_last, b_last = params["last"]
    p_in = _round_up_lanes(w_last.shape[0])
    p_out = _round_up_lanes(w_last.shape[1])
    packed.append(_pad2(w_last, p_in, p_out))
    packed.append(_pad2(b_last, 1, p_out))
    return tuple(jax.device_put(p) for p in packed)


# ------------------------------- Forward pass --------------------------------

def make_forward(node_sizes, batch):
    """Build a jitted forward taking (packed_params, x). Padding/packing of parameters
    happens once in pack_params(); the only per-call non-kernel work is one fused pad
    of x inside the jit."""
    num_hidden = len(node_sizes) - 1
    out_dim = 2
    p_in0 = _round_up_lanes(node_sizes[0])
    p_out_last = _round_up_lanes(out_dim)
    n_inputs = 1 + 3 * num_hidden + 2

    call = pl.pallas_call(
        functools.partial(_fused_mlp_kernel, num_hidden),
        out_shape=jax.ShapeDtypeStruct((batch, p_out_last), jnp.float32),
        in_specs=[_VMEM_SPEC] * n_inputs,
        out_specs=_VMEM_SPEC,
    )

    @jax.jit
    def forward(packed, x):
        x_pad = jnp.pad(x, ((0, 0), (0, p_in0 - x.shape[1])))
        out_padded = call(x_pad, *packed)
        return out_padded[:, :out_dim]

    return forward


# ------------------------------ Reference (JAX) -------------------------------

def milab_forward_ref(params, x):
    """Pure-JAX reference with full PyTorch semantics (hidden biases kept)."""
    h = x
    for (w, b, gamma, beta) in params["hidden"]:
        y = h @ w + b
        mu = jnp.mean(y, axis=0, keepdims=True)
        var = jnp.mean((y - mu) ** 2, axis=0, keepdims=True)
        y = (y - mu) / jnp.sqrt(var + 1e-5) * gamma + beta
        h = jnp.maximum(y, 0.0)
    w_last, b_last = params["last"]
    return h @ w_last + b_last


# ----------------------------------- Main -------------------------------------

if __name__ == "__main__":
    # fc 32->64, bn, relu, drop, fc 64->64, bn, relu, drop, fc 64->2
    node_sizes = [32, 64, 64]
    batch = 8

    key = jax.random.PRNGKey(0)
    key, kx = jax.random.split(key)
    x = jax.random.normal(kx, (batch, node_sizes[0]), jnp.float32)

    params = init_params(node_sizes, key)

    # One-time packing (hoisted out of the per-call path), then a single jitted call.
    packed = pack_params(params, node_sizes)
    forward = make_forward(node_sizes, batch)

    out = forward(packed, x)
    out = jax.block_until_ready(out)

    ref = milab_forward_ref(params, x)
    assert out.shape == (batch, 2), out.shape
    assert jnp.allclose(out, ref, atol=1e-4, rtol=1e-4), "mismatch vs JAX reference"

    print("KERNEL_OK")
</pallas_src>

<mosaic_0001>
module attributes {stable_mosaic.version = 11 : i64} {
  func.func @_fused_mlp_kernel(%arg0: memref<8x128xf32, #tpu.memory_space<vmem>>, %arg1: memref<128x128xf32, #tpu.memory_space<vmem>>, %arg2: memref<1x128xf32, #tpu.memory_space<vmem>>, %arg3: memref<1x128xf32, #tpu.memory_space<vmem>>, %arg4: memref<128x128xf32, #tpu.memory_space<vmem>>, %arg5: memref<1x128xf32, #tpu.memory_space<vmem>>, %arg6: memref<1x128xf32, #tpu.memory_space<vmem>>, %arg7: memref<128x128xf32, #tpu.memory_space<vmem>>, %arg8: memref<1x128xf32, #tpu.memory_space<vmem>>, %arg9: memref<8x128xf32, #tpu.memory_space<vmem>>) attributes {dimension_semantics = [], scalar_prefetch = 0 : i64, scratch_operands = 0 : i64, tpu.core_type = #tpu.core_type<tc>} {
    %c0 = arith.constant 0 : index
    %c0_0 = arith.constant 0 : index
    %0 = vector.load %arg0[%c0, %c0_0] : memref<8x128xf32, #tpu.memory_space<vmem>>, vector<8x128xf32>
    %c0_1 = arith.constant 0 : index
    %c0_2 = arith.constant 0 : index
    %1 = vector.load %arg2[%c0_1, %c0_2] : memref<1x128xf32, #tpu.memory_space<vmem>>, vector<1x128xf32>
    %c0_3 = arith.constant 0 : index
    %c0_4 = arith.constant 0 : index
    %2 = vector.load %arg3[%c0_3, %c0_4] : memref<1x128xf32, #tpu.memory_space<vmem>>, vector<1x128xf32>
    %c0_5 = arith.constant 0 : index
    %c0_6 = arith.constant 0 : index
    %3 = vector.load %arg1[%c0_5, %c0_6] : memref<128x128xf32, #tpu.memory_space<vmem>>, vector<128x128xf32>
    %cst = arith.constant dense<0.000000e+00> : vector<8x128xf32>
    %4 = tpu.matmul %0, %3, %cst {dimension_numbers = #tpu.dot_dimension_numbers<[1], [0], [0], [1], [0, 0, 1, 1], [], []>} : vector<8x128xf32>, vector<128x128xf32>, vector<8x128xf32> -> vector<8x128xf32>
    %cst_7 = arith.constant dense<0.000000e+00> : vector<128xf32>
    %5 = vector.multi_reduction <add>, %4, %cst_7 [0] : vector<8x128xf32> to vector<128xf32>
    %6 = vector.shape_cast %5 : vector<128xf32> to vector<1x128xf32>
    %cst_8 = arith.constant 8.000000e+00 : f32
    %7 = vector.broadcast %cst_8 : f32 to vector<1x128xf32>
    %8 = arith.divf %6, %7 : vector<1x128xf32>
    %9 = vector.broadcast %8 : vector<1x128xf32> to vector<8x128xf32>
    %10 = arith.subf %4, %9 : vector<8x128xf32>
    %11 = arith.mulf %10, %10 : vector<8x128xf32>
    %cst_9 = arith.constant dense<0.000000e+00> : vector<128xf32>
    %12 = vector.multi_reduction <add>, %11, %cst_9 [0] : vector<8x128xf32> to vector<128xf32>
    %13 = vector.shape_cast %12 : vector<128xf32> to vector<1x128xf32>
    %cst_10 = arith.constant 8.000000e+00 : f32
    %14 = vector.broadcast %cst_10 : f32 to vector<1x128xf32>
    %15 = arith.divf %13, %14 : vector<1x128xf32>
    %cst_11 = arith.constant 9.99999974E-6 : f32
    %16 = vector.broadcast %cst_11 : f32 to vector<1x128xf32>
    %17 = arith.addf %15, %16 : vector<1x128xf32>
    %18 = math.rsqrt %17 : vector<1x128xf32>
    %19 = arith.mulf %1, %18 : vector<1x128xf32>
    %20 = vector.broadcast %19 : vector<1x128xf32> to vector<8x128xf32>
    %21 = arith.mulf %10, %20 : vector<8x128xf32>
    %22 = vector.broadcast %2 : vector<1x128xf32> to vector<8x128xf32>
    %23 = arith.addf %21, %22 : vector<8x128xf32>
    %cst_12 = arith.constant 0.000000e+00 : f32
    %24 = vector.broadcast %cst_12 : f32 to vector<8x128xf32>
    %25 = arith.maximumf %23, %24 : vector<8x128xf32>
    %c0_13 = arith.constant 0 : index
    %c0_14 = arith.constant 0 : index
    %26 = vector.load %arg5[%c0_13, %c0_14] : memref<1x128xf32, #tpu.memory_space<vmem>>, vector<1x128xf32>
    %c0_15 = arith.constant 0 : index
    %c0_16 = arith.constant 0 : index
    %27 = vector.load %arg6[%c0_15, %c0_16] : memref<1x128xf32, #tpu.memory_space<vmem>>, vector<1x128xf32>
    %c0_17 = arith.constant 0 : index
    %c0_18 = arith.constant 0 : index
    %28 = vector.load %arg4[%c0_17, %c0_18] : memref<128x128xf32, #tpu.memory_space<vmem>>, vector<128x128xf32>
    %cst_19 = arith.constant dense<0.000000e+00> : vector<8x128xf32>
    %29 = tpu.matmul %25, %28, %cst_19 {dimension_numbers = #tpu.dot_dimension_numbers<[1], [0], [0], [1], [0, 0, 1, 1], [], []>} : vector<8x128xf32>, vector<128x128xf32>, vector<8x128xf32> -> vector<8x128xf32>
    %cst_20 = arith.constant dense<0.000000e+00> : vector<128xf32>
    %30 = vector.multi_reduction <add>, %29, %cst_20 [0] : vector<8x128xf32> to vector<128xf32>
    %31 = vector.shape_cast %30 : vector<128xf32> to vector<1x128xf32>
    %cst_21 = arith.constant 8.000000e+00 : f32
    %32 = vector.broadcast %cst_21 : f32 to vector<1x128xf32>
    %33 = arith.divf %31, %32 : vector<1x128xf32>
    %34 = vector.broadcast %33 : vector<1x128xf32> to vector<8x128xf32>
    %35 = arith.subf %29, %34 : vector<8x128xf32>
    %36 = arith.mulf %35, %35 : vector<8x128xf32>
    %cst_22 = arith.constant dense<0.000000e+00> : vector<128xf32>
    %37 = vector.multi_reduction <add>, %36, %cst_22 [0] : vector<8x128xf32> to vector<128xf32>
    %38 = vector.shape_cast %37 : vector<128xf32> to vector<1x128xf32>
    %cst_23 = arith.constant 8.000000e+00 : f32
    %39 = vector.broadcast %cst_23 : f32 to vector<1x128xf32>
    %40 = arith.divf %38, %39 : vector<1x128xf32>
    %cst_24 = arith.constant 9.99999974E-6 : f32
    %41 = vector.broadcast %cst_24 : f32 to vector<1x128xf32>
    %42 = arith.addf %40, %41 : vector<1x128xf32>
    %43 = math.rsqrt %42 : vector<1x128xf32>
    %44 = arith.mulf %26, %43 : vector<1x128xf32>
    %45 = vector.broadcast %44 : vector<1x128xf32> to vector<8x128xf32>
    %46 = arith.mulf %35, %45 : vector<8x128xf32>
    %47 = vector.broadcast %27 : vector<1x128xf32> to vector<8x128xf32>
    %48 = arith.addf %46, %47 : vector<8x128xf32>
    %cst_25 = arith.constant 0.000000e+00 : f32
    %49 = vector.broadcast %cst_25 : f32 to vector<8x128xf32>
    %50 = arith.maximumf %48, %49 : vector<8x128xf32>
    %c0_26 = arith.constant 0 : index
    %c0_27 = arith.constant 0 : index
    %51 = vector.load %arg7[%c0_26, %c0_27] : memref<128x128xf32, #tpu.memory_space<vmem>>, vector<128x128xf32>
    %cst_28 = arith.constant dense<0.000000e+00> : vector<8x128xf32>
    %52 = tpu.matmul %50, %51, %cst_28 {dimension_numbers = #tpu.dot_dimension_numbers<[1], [0], [0], [1], [0, 0, 1, 1], [], []>} : vector<8x128xf32>, vector<128x128xf32>, vector<8x128xf32> -> vector<8x128xf32>
    %c0_29 = arith.constant 0 : index
    %c0_30 = arith.constant 0 : index
    %53 = vector.load %arg8[%c0_29, %c0_30] : memref<1x128xf32, #tpu.memory_space<vmem>>, vector<1x128xf32>
    %54 = vector.broadcast %53 : vector<1x128xf32> to vector<8x128xf32>
    %55 = arith.addf %52, %54 : vector<8x128xf32>
    %c0_31 = arith.constant 0 : index
    %c0_32 = arith.constant 0 : index
    %56 = vector.load %arg9[%c0_31, %c0_32] : memref<8x128xf32, #tpu.memory_space<vmem>>, vector<8x128xf32>
    tpu.vector_store %arg9[%c0_31, %c0_32], %55 {strides = array<i32>} : memref<8x128xf32, #tpu.memory_space<vmem>>, vector<8x128xf32>,
    return
  }
}

</mosaic_0001>

<llo_original>
// kernel: forward.1
$region0: #{forward.1}
  #allocation0 [shape = 'u32[]', space=smem, size = 0x4, offset = 0x4, fixed_abs, tag = 'smem constant byte address 0x4 - core index']
  #allocation1 [shape = 'u32[144,128]{1,0:T(1,128)}', space=vmem, size = 0x12000, scoped, tag = 'internal scratch']
  %s0 = inlined_call_operand.vmem [shape: f32[8,128], index: 0, kind: input, shape index: {}]
  %s1 = inlined_call_operand.hbm [shape: f32[128,128], index: 1, kind: input, shape index: {}]
  %s2 = inlined_call_operand.vmem [shape: f32[1,128], index: 2, kind: input, shape index: {}]
  %s3 = inlined_call_operand.vmem [shape: f32[1,128], index: 3, kind: input, shape index: {}]
  %s4 = inlined_call_operand.hbm [shape: f32[128,128], index: 4, kind: input, shape index: {}]
  %s5 = inlined_call_operand.vmem [shape: f32[1,128], index: 5, kind: input, shape index: {}]
  %s6 = inlined_call_operand.vmem [shape: f32[1,128], index: 6, kind: input, shape index: {}]
  %s7 = inlined_call_operand.hbm [shape: f32[128,128], index: 7, kind: input, shape index: {}]
  %s8 = inlined_call_operand.vmem [shape: f32[1,128], index: 8, kind: input, shape index: {}]
  %s9 = inlined_call_operand.vmem [shape: f32[8,128], index: 9, kind: output, shape index: {}]
  %s10 = sld [smem:[#allocation0]]
  $region58: #{forward.1} parent=0
    _
  %s12 = ssub.s32 1, %s10
  %s13 = scalar_select 0, %s12, %s10
  $region1: #{forward.1} parent=0
    #allocation2 [shape = 'u8[65536]{0}', space=vmem, size = 0x10000, scoped, tag = 'input window, operand 1, single buffered']
    #allocation3 [shape = 's32[1]{0}', space=sflag, size = 0x4, scoped, tag = 'scoped memory for forward.1']
    #allocation4 [shape = 'u8[65536]{0}', space=vmem, size = 0x10000, scoped, tag = 'input window, operand 4, single buffered']
    #allocation5 [shape = 's32[1]{0}', space=sflag, size = 0x4, scoped, tag = 'scoped memory for forward.1']
    #allocation6 [shape = 'u8[65536]{0}', space=vmem, size = 0x10000, scoped, tag = 'input window, operand 7, single buffered']
    %14 = vsyncpa [#allocation3], 0
    %15 = vsyncpa [#allocation5], 0
    // Predicated region
    $region2: #{forward.1} parent=1 // pred_check
      _
    $region3: #{forward.1} parent=1 // pred_check_branch
      %17 = sbr.rel (0) target = $region5
    $region4: #{forward.1} parent=1 // pred_region
      _
    $region5: #{forward.1} parent=1 // pred_fallthru
      _
    // Predicated region
    $region6: #{forward.1} parent=1 // pred_check
      _
    $region7: #{forward.1} parent=1 // pred_check_branch
      %19 = sbr.rel (0) target = $region9
    $region8: #{forward.1} parent=1 // pred_region
      %s21 = ssub.s32 2048, 2048
      %22 = vsyncadd [#allocation3], %s21
      %s23 = sshll.u32 [#allocation2], 4
      %s24 = int_to_ptr.vmem [resolvable:$true] %s23
      %29 = dma.hbm_to_vmem [thread:$0]  %s1, 2048, %s24, [#allocation3], 128, 128, 8
    $region9: #{forward.1} parent=1 // pred_fallthru
      _
    // Predicated region
    $region10: #{forward.1} parent=1 // pred_check
      _
    $region11: #{forward.1} parent=1 // pred_check_branch
      %31 = sbr.rel (0) target = $region13
    $region12: #{forward.1} parent=1 // pred_region
      _
    $region13: #{forward.1} parent=1 // pred_fallthru
      _
    // Predicated region
    $region14: #{forward.1} parent=1 // pred_check
      _
    $region15: #{forward.1} parent=1 // pred_check_branch
      %33 = sbr.rel (0) target = $region17
    $region16: #{forward.1} parent=1 // pred_region
      _
    $region17: #{forward.1} parent=1 // pred_fallthru
      _
    // Predicated region
    $region18: #{forward.1} parent=1 // pred_check
      _
    $region19: #{forward.1} parent=1 // pred_check_branch
      %35 = sbr.rel (0) target = $region21
    $region20: #{forward.1} parent=1 // pred_region
      %s37 = ssub.s32 2048, 2048
      %38 = vsyncadd [#allocation5], %s37
      %s39 = sshll.u32 [#allocation4], 4
      %s40 = int_to_ptr.vmem [resolvable:$true] %s39
      %45 = dma.hbm_to_vmem [thread:$0]  %s4, 2048, %s40, [#allocation5], 128, 128, 8
    $region21: #{forward.1} parent=1 // pred_fallthru
      _
    // Predicated region
    $region22: #{forward.1} parent=1 // pred_check
      _
    $region23: #{forward.1} parent=1 // pred_check_branch
      %47 = sbr.rel (0) target = $region25
    $region24: #{forward.1} parent=1 // pred_region
      _
    $region25: #{forward.1} parent=1 // pred_fallthru
      _
    // Predicated region
    $region26: #{forward.1} parent=1 // pred_check
      _
    $region27: #{forward.1} parent=1 // pred_check_branch
      %49 = sbr.rel (0) target = $region29
    $region28: #{forward.1} parent=1 // pred_region
      _
    $region29: #{forward.1} parent=1 // pred_fallthru
      _
    // Predicated region
    $region30: #{forward.1} parent=1 // pred_check
      _
    $region31: #{forward.1} parent=1 // pred_check_branch
      %51 = sbr.rel (0) target = $region33
    $region32: #{forward.1} parent=1 // pred_region
      %s53 = ssub.s32 2048, 2048
      %54 = vsyncadd [#allocation5], %s53
      %s55 = sshll.u32 [#allocation6], 4
      %s56 = int_to_ptr.vmem [resolvable:$true] %s55
      %61 = dma.hbm_to_vmem [thread:$0]  %s7, 2048, %s56, [#allocation5], 128, 128, 8
    $region33: #{forward.1} parent=1 // pred_fallthru
      _
    // Predicated region
    $region34: #{forward.1} parent=1 // pred_check
      _
    $region35: #{forward.1} parent=1 // pred_check_branch
      %63 = sbr.rel (0) target = $region37
    $region36: #{forward.1} parent=1 // pred_region
      _
    $region37: #{forward.1} parent=1 // pred_fallthru
      _
    // Predicated region
    $region38: #{forward.1} parent=1 // pred_check
      _
    $region39: #{forward.1} parent=1 // pred_check_branch
      %65 = sbr.rel (0) target = $region41
    $region40: #{forward.1} parent=1 // pred_region
      %66 = dma.done [#allocation3], 2048
    $region41: #{forward.1} parent=1 // pred_fallthru
      _
    // Predicated region
    $region42: #{forward.1} parent=1 // pred_check
      _
    $region43: #{forward.1} parent=1 // pred_check_branch
      %68 = sbr.rel (0) target = $region45
    $region44: #{forward.1} parent=1 // pred_region
      %69 = dma.done [#allocation5], 2048
    $region45: #{forward.1} parent=1 // pred_fallthru
      _
    // Predicated region
    $region46: #{forward.1} parent=1 // pred_check
      _
    $region47: #{forward.1} parent=1 // pred_check_branch
      %71 = sbr.rel (0) target = $region49
    $region48: #{forward.1} parent=1 // pred_region
      %72 = dma.done [#allocation5], 2048
    $region49: #{forward.1} parent=1 // pred_fallthru
      _
    %v73 = vld [vmem:[%s0] sm:$0xff]
    %v74 = vld [vmem:[%s2] sm:$0x1]
    %v75 = vld [vmem:[%s3] sm:$0x1]
    %v76 = vld [vmem:[#allocation2] sm:$0xff]
    %v77 = vld [vmem:[#allocation2 + $0x8] sm:$0xff]
    %v78 = vld [vmem:[#allocation2 + $0x10] sm:$0xff]
    %v79 = vld [vmem:[#allocation2 + $0x18] sm:$0xff]
    %v80 = vld [vmem:[#allocation2 + $0x20] sm:$0xff]
    %v81 = vld [vmem:[#allocation2 + $0x28] sm:$0xff]
    %v82 = vld [vmem:[#allocation2 + $0x30] sm:$0xff]
    %v83 = vld [vmem:[#allocation2 + $0x38] sm:$0xff]
    %v84 = vld [vmem:[#allocation2 + $0x40] sm:$0xff]
    %v85 = vld [vmem:[#allocation2 + $0x48] sm:$0xff]
    %v86 = vld [vmem:[#allocation2 + $0x50] sm:$0xff]
    %v87 = vld [vmem:[#allocation2 + $0x58] sm:$0xff]
    %v88 = vld [vmem:[#allocation2 + $0x60] sm:$0xff]
    %v89 = vld [vmem:[#allocation2 + $0x68] sm:$0xff]
    %v90 = vld [vmem:[#allocation2 + $0x70] sm:$0xff]
    %v91 = vld [vmem:[#allocation2 + $0x78] sm:$0xff]
    %92 = vmatprep.subr.mxu0 0.0
    %93 = vmatpush1.msra.mxu0 %v76
    %94 = vmatprep.subr.mxu0 0.0
    %95 = vmatpush1.msra.mxu0 %v77
    %96 = vmatprep.subr.mxu0 0.0
    %97 = vmatpush1.msra.mxu0 %v78
    %98 = vmatprep.subr.mxu0 0.0
    %99 = vmatpush1.msra.mxu0 %v79
    %100 = vmatprep.subr.mxu0 0.0
    %101 = vmatpush1.msra.mxu0 %v80
    %102 = vmatprep.subr.mxu0 0.0
    %103 = vmatpush1.msra.mxu0 %v81
    %104 = vmatprep.subr.mxu0 0.0
    %105 = vmatpush1.msra.mxu0 %v82
    %106 = vmatprep.subr.mxu0 0.0
    %107 = vmatpush1.msra.mxu0 %v83
    %108 = vmatprep.subr.mxu0 0.0
    %109 = vmatpush1.msra.mxu0 %v84
    %110 = vmatprep.subr.mxu0 0.0
    %111 = vmatpush1.msra.mxu0 %v85
    %112 = vmatprep.subr.mxu0 0.0
    %113 = vmatpush1.msra.mxu0 %v86
    %114 = vmatprep.subr.mxu0 0.0
    %115 = vmatpush1.msra.mxu0 %v87
    %116 = vmatprep.subr.mxu0 0.0
    %117 = vmatpush1.msra.mxu0 %v88
    %118 = vmatprep.subr.mxu0 0.0
    %119 = vmatpush1.msra.mxu0 %v89
    %120 = vmatprep.subr.mxu0 0.0
    %121 = vmatpush1.msra.mxu0 %v90
    %122 = vmatprep.subr.mxu0 0.0
    %123 = vmatpush1.msra.mxu0 %v91
    %124 = vmatprep.subr.mxu0 0.0
    %125 = vmatpush1.msra.mxu0 0.0
    %126 = vmatprep.subr.mxu0 0.0
    %127 = vmatpush1.msra.mxu0 0.0
    %128 = vmatprep.subr.mxu0 0.0
    %129 = vmatpush1.msra.mxu0 0.0
    %130 = vmatprep.subr.mxu0 0.0
    %131 = vmatpush1.msra.mxu0 0.0
    %132 = vmatprep.subr.mxu0 0.0
    %133 = vmatpush1.msra.mxu0 0.0
    %134 = vmatprep.subr.mxu0 0.0
    %135 = vmatpush1.msra.mxu0 0.0
    %136 = vmatprep.subr.mxu0 0.0
    %137 = vmatpush1.msra.mxu0 0.0
    %138 = vmatprep.subr.mxu0 0.0
    %139 = vmatpush1.msra.mxu0 0.0
    %140 = vmatprep.subr.mxu0 0.0
    %141 = vmatpush1.msra.mxu0 0.0
    %142 = vmatprep.subr.mxu0 0.0
    %143 = vmatpush1.msra.mxu0 0.0
    %144 = vmatprep.subr.mxu0 0.0
    %145 = vmatpush1.msra.mxu0 0.0
    %146 = vmatprep.subr.mxu0 0.0
    %147 = vmatpush1.msra.mxu0 0.0
    %148 = vmatprep.subr.mxu0 0.0
    %149 = vmatpush1.msra.mxu0 0.0
    %150 = vmatprep.subr.mxu0 0.0
    %151 = vmatpush1.msra.mxu0 0.0
    %152 = vmatprep.subr.mxu0 0.0
    %153 = vmatpush1.msra.mxu0 0.0
    %154 = vmatprep.subr.mxu0 0.0
    %155 = vmatpush1.msra.mxu0 0.0
    %156 = vmatprep.mubr.f32.mxu0 0.0
    %157 = vmatmul.mubr.f32.gmra.mrb[0].mxu0 %v73
    %v158 = vpop.f32.mrb[0].mxu0
    %v159 = vadd.f32 0.0, %v158
    %v160 = vpop.f32.mrb[0].mxu0
    %161 = vdwg.mxu0
    %v162 = vrot.slane %v159, 4
    %v163 = vadd.f32 %v159, %v162
    %v164 = vrot.slane %v163, 2
    %v165 = vadd.f32 %v163, %v164
    %v166 = vrot.slane %v165, 1
    %v167 = vadd.f32 %v165, %v166
    %v168 = vrcp.pop 8.0
    %v169 = vmul.f32 %v167, %v168
    %v170 = vsub.f32 %v159, %v169
    %v171 = vmul.f32 %v170, %v170
    %v172 = vrot.slane %v171, 4
    %v173 = vadd.f32 %v171, %v172
    %v174 = vrot.slane %v173, 2
    %v175 = vadd.f32 %v173, %v174
    %v176 = vrot.slane %v175, 1
    %v177 = vadd.f32 %v175, %v176
    %v178 = vmul.f32 %v177, %v168
    %v179 = vadd.f32 %v178, 1e-05
    %v180 = vrsqrt.pop %v179
    %v181 = vmul.f32 %v74, %v180
    %v183 = vlaneseq
    %v184 = vshrl.u32 %v183, 7
    %v185 = vsub.s32 0, %v184
    %v186 = vrot.slane %v181, %v185
    %v188 = vmul.f32 %v170, %v186
    %v190 = vlaneseq
    %v191 = vshrl.u32 %v190, 7
    %v192 = vsub.s32 0, %v191
    %v193 = vrot.slane %v75, %v192
    %v195 = vadd.f32 %v188, %v193
    %v196 = vmax.f32 %v195, 0.0
    %v197 = vld [vmem:[%s5] sm:$0x1]
    %v198 = vld [vmem:[%s6] sm:$0x1]
    %v199 = vld [vmem:[#allocation4] sm:$0xff]
    %v200 = vld [vmem:[#allocation4 + $0x8] sm:$0xff]
    %v201 = vld [vmem:[#allocation4 + $0x10] sm:$0xff]
    %v202 = vld [vmem:[#allocation4 + $0x18] sm:$0xff]
    %v203 = vld [vmem:[#allocation4 + $0x20] sm:$0xff]
    %v204 = vld [vmem:[#allocation4 + $0x28] sm:$0xff]
    %v205 = vld [vmem:[#allocation4 + $0x30] sm:$0xff]
    %v206 = vld [vmem:[#allocation4 + $0x38] sm:$0xff]
    %v207 = vld [vmem:[#allocation4 + $0x40] sm:$0xff]
    %v208 = vld [vmem:[#allocation4 + $0x48] sm:$0xff]
    %v209 = vld [vmem:[#allocation4 + $0x50] sm:$0xff]
    %v210 = vld [vmem:[#allocation4 + $0x58] sm:$0xff]
    %v211 = vld [vmem:[#allocation4 + $0x60] sm:$0xff]
    %v212 = vld [vmem:[#allocation4 + $0x68] sm:$0xff]
    %v213 = vld [vmem:[#allocation4 + $0x70] sm:$0xff]
    %v214 = vld [vmem:[#allocation4 + $0x78] sm:$0xff]
    %215 = vmatprep.subr.mxu0 0.0
    %216 = vmatpush1.msra.mxu0 %v199
    %217 = vmatprep.subr.mxu0 0.0
    %218 = vmatpush1.msra.mxu0 %v200
    %219 = vmatprep.subr.mxu0 0.0
    %220 = vmatpush1.msra.mxu0 %v201
    %221 = vmatprep.subr.mxu0 0.0
    %222 = vmatpush1.msra.mxu0 %v202
    %223 = vmatprep.subr.mxu0 0.0
    %224 = vmatpush1.msra.mxu0 %v203
    %225 = vmatprep.subr.mxu0 0.0
    %226 = vmatpush1.msra.mxu0 %v204
    %227 = vmatprep.subr.mxu0 0.0
    %228 = vmatpush1.msra.mxu0 %v205
    %229 = vmatprep.subr.mxu0 0.0
    %230 = vmatpush1.msra.mxu0 %v206
    %231 = vmatprep.subr.mxu0 0.0
    %232 = vmatpush1.msra.mxu0 %v207
    %233 = vmatprep.subr.mxu0 0.0
    %234 = vmatpush1.msra.mxu0 %v208
    %235 = vmatprep.subr.mxu0 0.0
    %236 = vmatpush1.msra.mxu0 %v209
    %237 = vmatprep.subr.mxu0 0.0
    %238 = vmatpush1.msra.mxu0 %v210
    %239 = vmatprep.subr.mxu0 0.0
    %240 = vmatpush1.msra.mxu0 %v211
    %241 = vmatprep.subr.mxu0 0.0
    %242 = vmatpush1.msra.mxu0 %v212
    %243 = vmatprep.subr.mxu0 0.0
    %244 = vmatpush1.msra.mxu0 %v213
    %245 = vmatprep.subr.mxu0 0.0
    %246 = vmatpush1.msra.mxu0 %v214
    %247 = vmatprep.subr.mxu0 0.0
    %248 = vmatpush1.msra.mxu0 0.0
    %249 = vmatprep.subr.mxu0 0.0
    %250 = vmatpush1.msra.mxu0 0.0
    %251 = vmatprep.subr.mxu0 0.0
    %252 = vmatpush1.msra.mxu0 0.0
    %253 = vmatprep.subr.mxu0 0.0
    %254 = vmatpush1.msra.mxu0 0.0
    %255 = vmatprep.subr.mxu0 0.0
    %256 = vmatpush1.msra.mxu0 0.0
    %257 = vmatprep.subr.mxu0 0.0
    %258 = vmatpush1.msra.mxu0 0.0
    %259 = vmatprep.subr.mxu0 0.0
    %260 = vmatpush1.msra.mxu0 0.0
    %261 = vmatprep.subr.mxu0 0.0
    %262 = vmatpush1.msra.mxu0 0.0
    %263 = vmatprep.subr.mxu0 0.0
    %264 = vmatpush1.msra.mxu0 0.0
    %265 = vmatprep.subr.mxu0 0.0
    %266 = vmatpush1.msra.mxu0 0.0
    %267 = vmatprep.subr.mxu0 0.0
    %268 = vmatpush1.msra.mxu0 0.0
    %269 = vmatprep.subr.mxu0 0.0
    %270 = vmatpush1.msra.mxu0 0.0
    %271 = vmatprep.subr.mxu0 0.0
    %272 = vmatpush1.msra.mxu0 0.0
    %273 = vmatprep.subr.mxu0 0.0
    %274 = vmatpush1.msra.mxu0 0.0
    %275 = vmatprep.subr.mxu0 0.0
    %276 = vmatpush1.msra.mxu0 0.0
    %277 = vmatprep.subr.mxu0 0.0
    %278 = vmatpush1.msra.mxu0 0.0
    %279 = vmatprep.mubr.f32.mxu0 0.0
    %280 = vmatmul.mubr.f32.gmra.mrb[0].mxu0 %v196
    %v281 = vpop.f32.mrb[0].mxu0
    %v282 = vadd.f32 0.0, %v281
    %v283 = vpop.f32.mrb[0].mxu0
    %284 = vdwg.mxu0
    %v285 = vrot.slane %v282, 4
    %v286 = vadd.f32 %v282, %v285
    %v287 = vrot.slane %v286, 2
    %v288 = vadd.f32 %v286, %v287
    %v289 = vrot.slane %v288, 1
    %v290 = vadd.f32 %v288, %v289
    %v291 = vmul.f32 %v290, %v168
    %v292 = vsub.f32 %v282, %v291
    %v293 = vmul.f32 %v292, %v292
    %v294 = vrot.slane %v293, 4
    %v295 = vadd.f32 %v293, %v294
    %v296 = vrot.slane %v295, 2
    %v297 = vadd.f32 %v295, %v296
    %v298 = vrot.slane %v297, 1
    %v299 = vadd.f32 %v297, %v298
    %v300 = vmul.f32 %v299, %v168
    %v301 = vadd.f32 %v300, 1e-05
    %v302 = vrsqrt.pop %v301
    %v303 = vmul.f32 %v197, %v302
    %v305 = vlaneseq
    %v306 = vshrl.u32 %v305, 7
    %v307 = vsub.s32 0, %v306
    %v308 = vrot.slane %v303, %v307
    %v310 = vmul.f32 %v292, %v308
    %v312 = vlaneseq
    %v313 = vshrl.u32 %v312, 7
    %v314 = vsub.s32 0, %v313
    %v315 = vrot.slane %v198, %v314
    %v317 = vadd.f32 %v310, %v315
    %v318 = vmax.f32 %v317, 0.0
    %v319 = vld [vmem:[#allocation6] sm:$0xff]
    %v320 = vld [vmem:[#allocation6 + $0x8] sm:$0xff]
    %v321 = vld [vmem:[#allocation6 + $0x10] sm:$0xff]
    %v322 = vld [vmem:[#allocation6 + $0x18] sm:$0xff]
    %v323 = vld [vmem:[#allocation6 + $0x20] sm:$0xff]
    %v324 = vld [vmem:[#allocation6 + $0x28] sm:$0xff]
    %v325 = vld [vmem:[#allocation6 + $0x30] sm:$0xff]
    %v326 = vld [vmem:[#allocation6 + $0x38] sm:$0xff]
    %v327 = vld [vmem:[#allocation6 + $0x40] sm:$0xff]
    %v328 = vld [vmem:[#allocation6 + $0x48] sm:$0xff]
    %v329 = vld [vmem:[#allocation6 + $0x50] sm:$0xff]
    %v330 = vld [vmem:[#allocation6 + $0x58] sm:$0xff]
    %v331 = vld [vmem:[#allocation6 + $0x60] sm:$0xff]
    %v332 = vld [vmem:[#allocation6 + $0x68] sm:$0xff]
    %v333 = vld [vmem:[#allocation6 + $0x70] sm:$0xff]
    %v334 = vld [vmem:[#allocation6 + $0x78] sm:$0xff]
    %v335 = vld [vmem:[%s8] sm:$0x1]
    %v337 = vlaneseq
    %v338 = vshrl.u32 %v337, 7
    %v339 = vsub.s32 0, %v338
    %v340 = vrot.slane %v335, %v339
    %342 = vmatprep.subr.mxu0 0.0
    %343 = vmatpush1.msra.mxu0 %v319
    %344 = vmatprep.subr.mxu0 0.0
    %345 = vmatpush1.msra.mxu0 %v320
    %346 = vmatprep.subr.mxu0 0.0
    %347 = vmatpush1.msra.mxu0 %v321
    %348 = vmatprep.subr.mxu0 0.0
    %349 = vmatpush1.msra.mxu0 %v322
    %350 = vmatprep.subr.mxu0 0.0
    %351 = vmatpush1.msra.mxu0 %v323
    %352 = vmatprep.subr.mxu0 0.0
    %353 = vmatpush1.msra.mxu0 %v324
    %354 = vmatprep.subr.mxu0 0.0
    %355 = vmatpush1.msra.mxu0 %v325
    %356 = vmatprep.subr.mxu0 0.0
    %357 = vmatpush1.msra.mxu0 %v326
    %358 = vmatprep.subr.mxu0 0.0
    %359 = vmatpush1.msra.mxu0 %v327
    %360 = vmatprep.subr.mxu0 0.0
    %361 = vmatpush1.msra.mxu0 %v328
    %362 = vmatprep.subr.mxu0 0.0
    %363 = vmatpush1.msra.mxu0 %v329
    %364 = vmatprep.subr.mxu0 0.0
    %365 = vmatpush1.msra.mxu0 %v330
    %366 = vmatprep.subr.mxu0 0.0
    %367 = vmatpush1.msra.mxu0 %v331
    %368 = vmatprep.subr.mxu0 0.0
    %369 = vmatpush1.msra.mxu0 %v332
    %370 = vmatprep.subr.mxu0 0.0
    %371 = vmatpush1.msra.mxu0 %v333
    %372 = vmatprep.subr.mxu0 0.0
    %373 = vmatpush1.msra.mxu0 %v334
    %374 = vmatprep.subr.mxu0 0.0
    %375 = vmatpush1.msra.mxu0 0.0
    %376 = vmatprep.subr.mxu0 0.0
    %377 = vmatpush1.msra.mxu0 0.0
    %378 = vmatprep.subr.mxu0 0.0
    %379 = vmatpush1.msra.mxu0 0.0
    %380 = vmatprep.subr.mxu0 0.0
    %381 = vmatpush1.msra.mxu0 0.0
    %382 = vmatprep.subr.mxu0 0.0
    %383 = vmatpush1.msra.mxu0 0.0
    %384 = vmatprep.subr.mxu0 0.0
    %385 = vmatpush1.msra.mxu0 0.0
    %386 = vmatprep.subr.mxu0 0.0
    %387 = vmatpush1.msra.mxu0 0.0
    %388 = vmatprep.subr.mxu0 0.0
    %389 = vmatpush1.msra.mxu0 0.0
    %390 = vmatprep.subr.mxu0 0.0
    %391 = vmatpush1.msra.mxu0 0.0
    %392 = vmatprep.subr.mxu0 0.0
    %393 = vmatpush1.msra.mxu0 0.0
    %394 = vmatprep.subr.mxu0 0.0
    %395 = vmatpush1.msra.mxu0 0.0
    %396 = vmatprep.subr.mxu0 0.0
    %397 = vmatpush1.msra.mxu0 0.0
    %398 = vmatprep.subr.mxu0 0.0
    %399 = vmatpush1.msra.mxu0 0.0
    %400 = vmatprep.subr.mxu0 0.0
    %401 = vmatpush1.msra.mxu0 0.0
    %402 = vmatprep.subr.mxu0 0.0
    %403 = vmatpush1.msra.mxu0 0.0
    %404 = vmatprep.subr.mxu0 0.0
    %405 = vmatpush1.msra.mxu0 0.0
    %406 = vmatprep.mubr.f32.mxu0 0.0
    %407 = vmatmul.mubr.f32.gmra.mrb[0].mxu0 %v318
    %v408 = vpop.f32.mrb[0].mxu0
    %v409 = vadd.f32 %v340, %v408
    %v410 = vpop.f32.mrb[0].mxu0
    %411 = vdwg.mxu0
    %412 = vst [vmem:[%s9] sm:$0xff] %v409
    // Predicated region
    $region50: #{forward.1} parent=1 // pred_check
      _
    $region51: #{forward.1} parent=1 // pred_check_branch
      %414 = sbr.rel (0) target = $region53
    $region52: #{forward.1} parent=1 // pred_region
      _
    $region53: #{forward.1} parent=1 // pred_fallthru
      _
    // Predicated region
    $region54: #{forward.1} parent=1 // pred_check
      _
    $region55: #{forward.1} parent=1 // pred_check_branch
      %416 = sbr.rel (0) target = $region57
    $region56: #{forward.1} parent=1 // pred_region
      _
    $region57: #{forward.1} parent=1 // pred_fallthru
      _
    %417 = vsyncpa [#allocation3], 1
    %418 = vsyncpa [#allocation5], 1

</llo_original>
